<compile_context>
chip_gen: v6e
topology: v6e:2x2x1
jax: 0.10.0
libtpu: 0.0.40
codegen_flags: <defaults>
</compile_context>

<pallas_src>
import functools

import jax
import jax.numpy as jnp
from jax.experimental import pallas as pl
from jax.experimental.pallas import tpu as pltpu


def _round_up(x, m):
    return ((x + m - 1) // m) * m


def _merger_kernel(bp_ref, gt_ref, pk_ref, cls_ref,
                   pko_ref, clso_ref, cmo_ref, *, ignore_iou_thresh):
    # ---- load one (batch, N-tile) block, channel-first ----
    bp = bp_ref[0]            # (4, TN)   predicted corners, lane-dense
    gt = gt_ref[0]            # (M, 4)    ground-truth corners (tiny)

    al = bp[0:1, :]           # (1, TN)
    at = bp[1:2, :]
    ar = bp[2:3, :]
    ab = bp[3:4, :]

    bl = gt[:, 0:1]           # (M, 1)
    bt = gt[:, 1:2]
    br = gt[:, 2:3]
    bb = gt[:, 3:4]

    # ---- (M, TN) intersection / union, N dense on lanes ----
    iw = jnp.maximum(jnp.minimum(ar, br) - jnp.maximum(al, bl), 0.0)   # (M, TN)
    ih = jnp.maximum(jnp.minimum(ab, bb) - jnp.maximum(at, bt), 0.0)   # (M, TN)
    inter = iw * ih                                                    # (M, TN)

    area_a = (ar - al) * (ab - at)                                     # (1, TN)
    area_b = (br - bl) * (bb - bt)                                     # (M, 1)
    union = area_a + area_b - inter                                    # (M, TN)

    # max_m iou > t  <=>  exists m: inter > t * (union + eps)  -> no division
    hit = jnp.any(inter > ignore_iou_thresh * (union + 1e-15),
                  axis=0, keepdims=True)                               # (1, TN)
    dyn_obj = jnp.where(hit, -1.0, 0.0).astype(bp.dtype)               # (1, TN)

    # ---- merge prefetched targets with dynamic targets ----
    pk = pk_ref[0]            # (8, TN): [obj, cx, cy, sx, sy, wx, wy, pad]
    obj_t = pk[0:1, :]        # (1, TN)
    mask = obj_t > 0          # (1, TN) bool

    # "negative" slab: channel 0 -> dyn_obj, channels 1..7 -> 0  (pure VPU)
    ch = jax.lax.broadcasted_iota(jnp.int32, pk.shape, 0)              # (8, TN)
    neg = jnp.where(ch == 0, dyn_obj, jnp.zeros_like(dyn_obj))         # (8, TN)
    pko_ref[0] = jnp.where(mask, pk, neg)                              # single full store

    cls_t = cls_ref[0]        # (C, TN)
    mask_c = jnp.broadcast_to(mask, cls_t.shape)                       # hoisted once
    clso_ref[0] = jnp.where(mask_c, cls_t, jnp.full_like(cls_t, -1.0))
    cmo_ref[0] = jnp.logical_and(mask_c, cls_t >= 0).astype(cls_t.dtype)


def yolo_v3_target_merger(box_preds, gt_boxes, obj_t, centers_t, scales_t,
                          weights_t, clas_t, *, num_class, ignore_iou_thresh,
                          tile_n=512):
    """Pallas implementation of YOLOV3TargetMerger.forward (label_smooth=False).

    Inputs follow the PyTorch layout:
      box_preds (B, N, 4) (or (B, -1, 4) reshapeable), gt_boxes (B, M, 4),
      obj_t (B, N, 1), centers_t/scales_t/weights_t (B, N, 2),
      clas_t (B, N, num_class).
    """
    b = box_preds.shape[0]
    box_preds = box_preds.reshape(b, -1, 4)
    n = box_preds.shape[1]
    m = gt_boxes.shape[1]
    c = num_class
    dt = box_preds.dtype

    # --- tiling: lane-dense N tiles, multiple of 128 ---
    tn = min(int(tile_n), _round_up(n, 128))
    tn = _round_up(tn, 128)
    n_pad = _round_up(n, tn)
    n_tiles = n_pad // tn
    pad = n_pad - n

    # --- layout plumbing: channel-first + packed small-channel slab ---
    bp_cf = jnp.transpose(box_preds, (0, 2, 1))                       # (B, 4, N)
    pack_in = jnp.concatenate(
        [obj_t, centers_t, scales_t, weights_t,
         jnp.zeros((b, n, 1), dt)], axis=-1)                          # (B, N, 8)
    pack_cf = jnp.transpose(pack_in, (0, 2, 1))                       # (B, 8, N)
    cls_cf = jnp.transpose(clas_t, (0, 2, 1))                         # (B, C, N)
    if pad:
        pad_cfg = ((0, 0), (0, 0), (0, pad))
        bp_cf = jnp.pad(bp_cf, pad_cfg)      # padded anchors: zero boxes -> iou 0
        pack_cf = jnp.pad(pack_cf, pad_cfg)  # padded anchors: obj_t 0 -> negative
        cls_cf = jnp.pad(cls_cf, pad_cfg)

    def cf_spec(ch):
        return pl.BlockSpec((1, ch, tn), lambda i, j: (i, 0, j))

    gt_spec = pl.BlockSpec((1, m, 4), lambda i, j: (i, 0, 0))

    out_shapes = (
        jax.ShapeDtypeStruct((b, 8, n_pad), dt),   # packed: obj, cen, sca, wgt
        jax.ShapeDtypeStruct((b, c, n_pad), dt),   # class targets
        jax.ShapeDtypeStruct((b, c, n_pad), dt),   # class mask
    )

    kernel = functools.partial(_merger_kernel,
                               ignore_iou_thresh=float(ignore_iou_thresh))

    pack_o, cls_o, cmask_o = pl.pallas_call(
        kernel,
        out_shape=out_shapes,
        grid_spec=pltpu.PrefetchScalarGridSpec(
            num_scalar_prefetch=0,
            grid=(b, n_tiles),
            in_specs=[cf_spec(4), gt_spec, cf_spec(8), cf_spec(c)],
            out_specs=[cf_spec(8), cf_spec(c), cf_spec(c)],
        ),
        compiler_params=pltpu.CompilerParams(
            dimension_semantics=("parallel", "parallel")),
    )(bp_cf, gt_boxes, pack_cf, cls_cf)

    # --- unpack back to the PyTorch (B, N, C) layout ---
    pack_o = jnp.transpose(pack_o, (0, 2, 1))[:, :n, :]               # (B, N, 8)
    objectness = pack_o[:, :, 0:1]
    centers = pack_o[:, :, 1:3]
    scales = pack_o[:, :, 3:5]
    weights = pack_o[:, :, 5:7]
    class_t = jnp.transpose(cls_o, (0, 2, 1))[:, :n, :]
    class_mask = jnp.transpose(cmask_o, (0, 2, 1))[:, :n, :]
    return objectness, centers, scales, weights, class_t, class_mask


def _reference(box_preds, gt_boxes, obj_t, centers_t, scales_t, weights_t,
               clas_t, *, num_class, ignore_iou_thresh):
    """Pure-JAX reference matching the PyTorch semantics."""
    b = box_preds.shape[0]
    bp = box_preds.reshape(b, -1, 4)
    al, at, ar, ab = [bp[..., i:i + 1] for i in range(4)]              # (B, N, 1)
    bl, bt, br, bb = [gt_boxes[..., i][:, None, :] for i in range(4)]  # (B, 1, M)
    iw = jnp.clip(jnp.minimum(ar, br) - jnp.maximum(al, bl), 0.0, 6.55040e4)
    ih = jnp.clip(jnp.minimum(ab, bb) - jnp.maximum(at, bt), 0.0, 6.55040e4)
    inter = iw * ih
    area_a = (ar - al) * (ab - at)
    area_b = (br - bl) * (bb - bt)
    iou = inter / (area_a + area_b - inter + 1e-15)
    ious_max = jnp.max(iou, axis=-1, keepdims=True)
    dyn_obj = (ious_max > ignore_iou_thresh).astype(bp.dtype) * -1.0

    mask = obj_t > 0
    objectness = jnp.where(mask, obj_t, dyn_obj)
    centers = jnp.where(mask, centers_t, 0.0)
    scales = jnp.where(mask, scales_t, 0.0)
    weights = jnp.where(mask, weights_t, 0.0)
    class_t = jnp.where(mask, clas_t, -1.0)
    class_mask = jnp.logical_and(mask, class_t >= 0).astype(weights.dtype)
    return objectness, centers, scales, weights, class_t, class_mask


if __name__ == "__main__":
    num_class = 8
    ignore_iou_thresh = 0.5
    B, N, M = 2, 128, 8

    key = jax.random.PRNGKey(0)
    k = jax.random.split(key, 8)

    # predicted boxes: corner format, positive sizes
    p_xy = jax.random.uniform(k[0], (B, N, 2), jnp.float32, 0.0, 10.0)
    p_wh = jax.random.uniform(k[1], (B, N, 2), jnp.float32, 0.5, 4.0)
    box_preds = jnp.concatenate([p_xy, p_xy + p_wh], axis=-1)          # (B, N, 4)

    g_xy = jax.random.uniform(k[2], (B, M, 2), jnp.float32, 0.0, 10.0)
    g_wh = jax.random.uniform(k[3], (B, M, 2), jnp.float32, 0.5, 4.0)
    gt_boxes = jnp.concatenate([g_xy, g_xy + g_wh], axis=-1)           # (B, M, 4)

    # prefetched targets (some anchors positive)
    obj_t = (jax.random.uniform(k[4], (B, N, 1)) > 0.8).astype(jnp.float32)
    centers_t = jax.random.uniform(k[5], (B, N, 2), jnp.float32)
    scales_t = jax.random.normal(k[6], (B, N, 2), jnp.float32)
    weights_t = jax.random.uniform(k[7], (B, N, 2), jnp.float32)
    cls_idx = jax.random.randint(jax.random.PRNGKey(1), (B, N), 0, num_class)
    clas_t = jax.nn.one_hot(cls_idx, num_class, dtype=jnp.float32)

    outs = yolo_v3_target_merger(
        box_preds, gt_boxes, obj_t, centers_t, scales_t, weights_t, clas_t,
        num_class=num_class, ignore_iou_thresh=ignore_iou_thresh)
    outs = jax.block_until_ready(outs)

    refs = _reference(
        box_preds, gt_boxes, obj_t, centers_t, scales_t, weights_t, clas_t,
        num_class=num_class, ignore_iou_thresh=ignore_iou_thresh)

    import numpy as np
    for o, r in zip(outs, refs):
        np.testing.assert_allclose(np.asarray(o), np.asarray(r),
                                   rtol=1e-5, atol=1e-5)

    print("KERNEL_OK")
</pallas_src>

<mosaic_0001>
module attributes {stable_mosaic.version = 11 : i64} {
  func.func @_merger_kernel(%arg0: i32, %arg1: i32, %arg2: memref<1x4x128xf32, #tpu.memory_space<vmem>>, %arg3: memref<1x8x4xf32, #tpu.memory_space<vmem>>, %arg4: memref<1x8x128xf32, #tpu.memory_space<vmem>>, %arg5: memref<1x8x128xf32, #tpu.memory_space<vmem>>, %arg6: memref<1x8x128xf32, #tpu.memory_space<vmem>>, %arg7: memref<1x8x128xf32, #tpu.memory_space<vmem>>, %arg8: memref<1x8x128xf32, #tpu.memory_space<vmem>>) attributes {dimension_semantics = [#tpu.dimension_semantics<parallel>, #tpu.dimension_semantics<parallel>], iteration_bounds = array<i64: 2, 1>, scalar_prefetch = 0 : i64, scratch_operands = 0 : i64, tpu.core_type = #tpu.core_type<tc>, window_params = [{transform_indices = @transform_0, window_bounds = array<i64: 1, 4, 128>}, {transform_indices = @transform_1, window_bounds = array<i64: 1, 8, 4>}, {transform_indices = @transform_2, window_bounds = array<i64: 1, 8, 128>}, {transform_indices = @transform_3, window_bounds = array<i64: 1, 8, 128>}, {transform_indices = @transform_4, window_bounds = array<i64: 1, 8, 128>}, {transform_indices = @transform_5, window_bounds = array<i64: 1, 8, 128>}, {transform_indices = @transform_6, window_bounds = array<i64: 1, 8, 128>}]} {
    %c0 = arith.constant 0 : index
    %c0_0 = arith.constant 0 : index
    %c0_1 = arith.constant 0 : index
    %0 = vector.load %arg2[%c0, %c0_0, %c0_1] : memref<1x4x128xf32, #tpu.memory_space<vmem>>, vector<1x4x128xf32>
    %1 = vector.shape_cast %0 : vector<1x4x128xf32> to vector<4x128xf32>
    %c0_2 = arith.constant 0 : index
    %c0_3 = arith.constant 0 : index
    %c0_4 = arith.constant 0 : index
    %2 = vector.load %arg3[%c0_2, %c0_3, %c0_4] : memref<1x8x4xf32, #tpu.memory_space<vmem>>, vector<1x8x4xf32>
    %3 = vector.shape_cast %2 : vector<1x8x4xf32> to vector<8x4xf32>
    %4 = vector.extract_strided_slice %1 {offsets = [0, 0], sizes = [1, 128], strides = [1, 1]} : vector<4x128xf32> to vector<1x128xf32>
    %5 = vector.extract_strided_slice %1 {offsets = [1, 0], sizes = [1, 128], strides = [1, 1]} : vector<4x128xf32> to vector<1x128xf32>
    %6 = vector.extract_strided_slice %1 {offsets = [2, 0], sizes = [1, 128], strides = [1, 1]} : vector<4x128xf32> to vector<1x128xf32>
    %7 = vector.extract_strided_slice %1 {offsets = [3, 0], sizes = [1, 128], strides = [1, 1]} : vector<4x128xf32> to vector<1x128xf32>
    %8 = vector.extract_strided_slice %3 {offsets = [0, 0], sizes = [8, 1], strides = [1, 1]} : vector<8x4xf32> to vector<8x1xf32>
    %9 = vector.extract_strided_slice %3 {offsets = [0, 1], sizes = [8, 1], strides = [1, 1]} : vector<8x4xf32> to vector<8x1xf32>
    %10 = vector.extract_strided_slice %3 {offsets = [0, 2], sizes = [8, 1], strides = [1, 1]} : vector<8x4xf32> to vector<8x1xf32>
    %11 = vector.extract_strided_slice %3 {offsets = [0, 3], sizes = [8, 1], strides = [1, 1]} : vector<8x4xf32> to vector<8x1xf32>
    %12 = vector.broadcast %6 : vector<1x128xf32> to vector<8x128xf32>
    %13 = vector.broadcast %10 : vector<8x1xf32> to vector<8x128xf32>
    %14 = arith.minimumf %12, %13 : vector<8x128xf32>
    %15 = vector.broadcast %4 : vector<1x128xf32> to vector<8x128xf32>
    %16 = vector.broadcast %8 : vector<8x1xf32> to vector<8x128xf32>
    %17 = arith.maximumf %15, %16 : vector<8x128xf32>
    %18 = arith.subf %14, %17 : vector<8x128xf32>
    %cst = arith.constant 0.000000e+00 : f32
    %19 = vector.broadcast %cst : f32 to vector<8x128xf32>
    %20 = arith.maximumf %18, %19 : vector<8x128xf32>
    %21 = vector.broadcast %7 : vector<1x128xf32> to vector<8x128xf32>
    %22 = vector.broadcast %11 : vector<8x1xf32> to vector<8x128xf32>
    %23 = arith.minimumf %21, %22 : vector<8x128xf32>
    %24 = vector.broadcast %5 : vector<1x128xf32> to vector<8x128xf32>
    %25 = vector.broadcast %9 : vector<8x1xf32> to vector<8x128xf32>
    %26 = arith.maximumf %24, %25 : vector<8x128xf32>
    %27 = arith.subf %23, %26 : vector<8x128xf32>
    %cst_5 = arith.constant 0.000000e+00 : f32
    %28 = vector.broadcast %cst_5 : f32 to vector<8x128xf32>
    %29 = arith.maximumf %27, %28 : vector<8x128xf32>
    %30 = arith.mulf %20, %29 : vector<8x128xf32>
    %31 = arith.subf %6, %4 : vector<1x128xf32>
    %32 = arith.subf %7, %5 : vector<1x128xf32>
    %33 = arith.mulf %31, %32 : vector<1x128xf32>
    %34 = arith.subf %10, %8 : vector<8x1xf32>
    %35 = arith.subf %11, %9 : vector<8x1xf32>
    %36 = arith.mulf %34, %35 : vector<8x1xf32>
    %37 = vector.broadcast %33 : vector<1x128xf32> to vector<8x128xf32>
    %38 = vector.broadcast %36 : vector<8x1xf32> to vector<8x128xf32>
    %39 = arith.addf %37, %38 : vector<8x128xf32>
    %40 = arith.subf %39, %30 : vector<8x128xf32>
    %cst_6 = arith.constant 1.000000e-15 : f32
    %41 = vector.broadcast %cst_6 : f32 to vector<8x128xf32>
    %42 = arith.addf %40, %41 : vector<8x128xf32>
    %cst_7 = arith.constant 5.000000e-01 : f32
    %43 = vector.broadcast %cst_7 : f32 to vector<8x128xf32>
    %44 = arith.mulf %43, %42 : vector<8x128xf32>
    %45 = arith.cmpf ogt, %30, %44 : vector<8x128xf32>
    %cst_8 = arith.constant 1.000000e+00 : f32
    %cst_9 = arith.constant 0.000000e+00 : f32
    %46 = vector.broadcast %cst_8 : f32 to vector<8x128xf32>
    %47 = vector.broadcast %cst_9 : f32 to vector<8x128xf32>
    %48 = arith.select %45, %46, %47 : vector<8x128xi1>, vector<8x128xf32>
    %cst_10 = arith.constant dense<0xFF800000> : vector<128xf32>
    %49 = vector.multi_reduction <maximumf>, %48, %cst_10 [0] : vector<8x128xf32> to vector<128xf32>
    %cst_11 = arith.constant 0.000000e+00 : f32
    %50 = vector.broadcast %cst_11 : f32 to vector<128xf32>
    %51 = arith.cmpf ogt, %49, %50 : vector<128xf32>
    %52 = vector.shape_cast %51 : vector<128xi1> to vector<1x128xi1>
    %cst_12 = arith.constant -1.000000e+00 : f32
    %cst_13 = arith.constant 0.000000e+00 : f32
    %53 = vector.broadcast %cst_12 : f32 to vector<1x128xf32>
    %54 = vector.broadcast %cst_13 : f32 to vector<1x128xf32>
    %55 = arith.select %52, %53, %54 : vector<1x128xi1>, vector<1x128xf32>
    %c0_14 = arith.constant 0 : index
    %c0_15 = arith.constant 0 : index
    %c0_16 = arith.constant 0 : index
    %56 = vector.load %arg4[%c0_14, %c0_15, %c0_16] : memref<1x8x128xf32, #tpu.memory_space<vmem>>, vector<1x8x128xf32>
    %57 = vector.shape_cast %56 : vector<1x8x128xf32> to vector<8x128xf32>
    %58 = vector.extract_strided_slice %57 {offsets = [0, 0], sizes = [1, 128], strides = [1, 1]} : vector<8x128xf32> to vector<1x128xf32>
    %cst_17 = arith.constant 0.000000e+00 : f32
    %59 = vector.broadcast %cst_17 : f32 to vector<1x128xf32>
    %60 = arith.cmpf ogt, %58, %59 : vector<1x128xf32>
    %61 = tpu.iota {dimensions = array<i32: 0>} : vector<8x128xi32>
    %c0_i32 = arith.constant 0 : i32
    %62 = vector.broadcast %c0_i32 : i32 to vector<8x128xi32>
    %63 = arith.cmpi eq, %61, %62 : vector<8x128xi32>
    %cst_18 = arith.constant 0.000000e+00 : f32
    %64 = vector.broadcast %cst_18 : f32 to vector<1x128xf32>
    %65 = vector.shape_cast %55 : vector<1x128xf32> to vector<1x128xf32>
    %66 = vector.broadcast %65 : vector<1x128xf32> to vector<8x128xf32>
    %67 = vector.shape_cast %64 : vector<1x128xf32> to vector<1x128xf32>
    %68 = vector.broadcast %67 : vector<1x128xf32> to vector<8x128xf32>
    %69 = arith.select %63, %66, %68 : vector<8x128xi1>, vector<8x128xf32>
    %70 = vector.shape_cast %60 : vector<1x128xi1> to vector<1x128xi1>
    %71 = vector.broadcast %70 : vector<1x128xi1> to vector<8x128xi1>
    %72 = arith.select %71, %57, %69 : vector<8x128xi1>, vector<8x128xf32>
    %c0_19 = arith.constant 0 : index
    %c0_20 = arith.constant 0 : index
    %c0_21 = arith.constant 0 : index
    %73 = vector.load %arg6[%c0_19, %c0_20, %c0_21] : memref<1x8x128xf32, #tpu.memory_space<vmem>>, vector<1x8x128xf32>
    %74 = vector.shape_cast %73 : vector<1x8x128xf32> to vector<8x128xf32>
    %75 = vector.shape_cast %72 : vector<8x128xf32> to vector<1x8x128xf32>
    tpu.vector_store %arg6[%c0_19, %c0_20, %c0_21], %75 {strides = array<i32>} : memref<1x8x128xf32, #tpu.memory_space<vmem>>, vector<1x8x128xf32>,
    %c0_22 = arith.constant 0 : index
    %c0_23 = arith.constant 0 : index
    %c0_24 = arith.constant 0 : index
    %76 = vector.load %arg5[%c0_22, %c0_23, %c0_24] : memref<1x8x128xf32, #tpu.memory_space<vmem>>, vector<1x8x128xf32>
    %77 = vector.shape_cast %76 : vector<1x8x128xf32> to vector<8x128xf32>
    %78 = vector.shape_cast %60 : vector<1x128xi1> to vector<1x128xi1>
    %79 = vector.broadcast %78 : vector<1x128xi1> to vector<8x128xi1>
    %cst_25 = arith.constant -1.000000e+00 : f32
    %80 = vector.broadcast %cst_25 : f32 to vector<8x128xf32>
    %81 = arith.select %79, %77, %80 : vector<8x128xi1>, vector<8x128xf32>
    %c0_26 = arith.constant 0 : index
    %c0_27 = arith.constant 0 : index
    %c0_28 = arith.constant 0 : index
    %82 = vector.load %arg7[%c0_26, %c0_27, %c0_28] : memref<1x8x128xf32, #tpu.memory_space<vmem>>, vector<1x8x128xf32>
    %83 = vector.shape_cast %82 : vector<1x8x128xf32> to vector<8x128xf32>
    %84 = vector.shape_cast %81 : vector<8x128xf32> to vector<1x8x128xf32>
    tpu.vector_store %arg7[%c0_26, %c0_27, %c0_28], %84 {strides = array<i32>} : memref<1x8x128xf32, #tpu.memory_space<vmem>>, vector<1x8x128xf32>,
    %cst_29 = arith.constant 0.000000e+00 : f32
    %85 = vector.broadcast %cst_29 : f32 to vector<8x128xf32>
    %86 = arith.cmpf oge, %77, %85 : vector<8x128xf32>
    %87 = arith.andi %79, %86 : vector<8x128xi1>
    %88 = arith.extui %87 : vector<8x128xi1> to vector<8x128xi32>
    %89 = arith.sitofp %88 : vector<8x128xi32> to vector<8x128xf32>
    %c0_30 = arith.constant 0 : index
    %c0_31 = arith.constant 0 : index
    %c0_32 = arith.constant 0 : index
    %90 = vector.load %arg8[%c0_30, %c0_31, %c0_32] : memref<1x8x128xf32, #tpu.memory_space<vmem>>, vector<1x8x128xf32>
    %91 = vector.shape_cast %90 : vector<1x8x128xf32> to vector<8x128xf32>
    %92 = vector.shape_cast %89 : vector<8x128xf32> to vector<1x8x128xf32>
    tpu.vector_store %arg8[%c0_30, %c0_31, %c0_32], %92 {strides = array<i32>} : memref<1x8x128xf32, #tpu.memory_space<vmem>>, vector<1x8x128xf32>,
    return
  }
  func.func @transform_0(%arg0: i32, %arg1: i32) -> (i32, i32, i32) {
    %c0_i32 = arith.constant 0 : i32
    %c0_i32_0 = arith.constant 0 : i32
    return %arg0, %c0_i32, %arg1 : i32, i32, i32
  }
  func.func @transform_1(%arg0: i32, %arg1: i32) -> (i32, i32, i32) {
    %c0_i32 = arith.constant 0 : i32
    %c0_i32_0 = arith.constant 0 : i32
    %c0_i32_1 = arith.constant 0 : i32
    return %arg0, %c0_i32, %c0_i32_0 : i32, i32, i32
  }
  func.func @transform_2(%arg0: i32, %arg1: i32) -> (i32, i32, i32) {
    %c0_i32 = arith.constant 0 : i32
    %c0_i32_0 = arith.constant 0 : i32
    return %arg0, %c0_i32, %arg1 : i32, i32, i32
  }
  func.func @transform_3(%arg0: i32, %arg1: i32) -> (i32, i32, i32) {
    %c0_i32 = arith.constant 0 : i32
    %c0_i32_0 = arith.constant 0 : i32
    return %arg0, %c0_i32, %arg1 : i32, i32, i32
  }
  func.func @transform_4(%arg0: i32, %arg1: i32) -> (i32, i32, i32) {
    %c0_i32 = arith.constant 0 : i32
    %c0_i32_0 = arith.constant 0 : i32
    return %arg0, %c0_i32, %arg1 : i32, i32, i32
  }
  func.func @transform_5(%arg0: i32, %arg1: i32) -> (i32, i32, i32) {
    %c0_i32 = arith.constant 0 : i32
    %c0_i32_0 = arith.constant 0 : i32
    return %arg0, %c0_i32, %arg1 : i32, i32, i32
  }
  func.func @transform_6(%arg0: i32, %arg1: i32) -> (i32, i32, i32) {
    %c0_i32 = arith.constant 0 : i32
    %c0_i32_0 = arith.constant 0 : i32
    return %arg0, %c0_i32, %arg1 : i32, i32, i32
  }
}

</mosaic_0001>

<llo_original>
// kernel: tpu_custom_call.1
$region0: #{tpu_custom_call.1}
  #allocation0 [shape = 'u32[]', space=smem, size = 0x4, offset = 0x4, fixed_abs, tag = 'smem constant byte address 0x4 - core index']
  #allocation1 [shape = 'u32[144,128]{1,0:T(1,128)}', space=vmem, size = 0x12000, scoped, tag = 'internal scratch']
  %s0 = inlined_call_operand.vmem [shape: f32[2,4,128], index: 0, kind: input, shape index: {}]
  %s1 = inlined_call_operand.vmem [shape: f32[2,8,4], index: 1, kind: input, shape index: {}]
  %s2 = inlined_call_operand.vmem [shape: f32[2,8,128], index: 2, kind: input, shape index: {}]
  %s3 = inlined_call_operand.hbm [shape: f32[2,8,128], index: 3, kind: input, shape index: {}]
  %s4 = inlined_call_operand.hbm [shape: f32[2,8,128], index: 4, kind: output, shape index: {0}]
  %s5 = inlined_call_operand.hbm [shape: f32[2,8,128], index: 5, kind: output, shape index: {1}]
  %s6 = inlined_call_operand.hbm [shape: f32[2,8,128], index: 6, kind: output, shape index: {2}]
  %7 = xla_tuple %s4, %s5, %s6
  %s8 = sld [smem:[#allocation0]]
  $region69: #{tpu_custom_call.1} parent=0
    _
  %s10 = ssub.s32 1, %s8
  %s11 = scalar_select 0, %s10, %s8
  $region1: #{tpu_custom_call.1} parent=0
    #allocation2 [shape = 'u8[8192]{0}', space=vmem, size = 0x2000, scoped, tag = 'input window, operand 3']
    #allocation3 [shape = 's32[2]{0}', space=sflag, size = 0x8, scoped, tag = 'scoped memory for tpu_custom_call.1']
    #allocation4 [shape = 's32[2]{0}', space=sflag, size = 0x8, scoped, tag = 'scoped memory for tpu_custom_call.1']
    #allocation5 [shape = 'u8[8192]{0}', space=vmem, size = 0x2000, scoped, tag = 'output window, operand 0']
    #allocation6 [shape = 'u8[8192]{0}', space=vmem, size = 0x2000, scoped, tag = 'output window, operand 1']
    #allocation7 [shape = 's32[2]{0}', space=sflag, size = 0x8, scoped, tag = 'scoped memory for tpu_custom_call.1']
    #allocation8 [shape = 'u8[8192]{0}', space=vmem, size = 0x2000, scoped, tag = 'output window, operand 2']
    %12 = vsyncpa [#allocation3], 0
    %s13 = scalar_lea.sflag [#allocation3], 1
    %14 = vsyncpa %s13, 0
    %15 = vsyncpa [#allocation4], 0
    %s16 = scalar_lea.sflag [#allocation4], 1
    %17 = vsyncpa %s16, 0
    %18 = vsyncpa [#allocation7], 0
    %s19 = scalar_lea.sflag [#allocation7], 1
    %20 = vsyncpa %s19, 0
    loop: start=0, step=1, limit=4
    $region2: #{tpu_custom_call.1} parent=1 // loop_pre_header
      _
    $region3: #{tpu_custom_call.1} parent=1 // loop_header
      %s22 = sphi 0, %s26
      %p23 = scmp.ge.s32.totalorder %s22, 4
      %s29 = sphi 0, %s41
      %s30 = sphi 0, %s37
      %s31 = sphi 0, %s29
      %s32 = sphi 0, %s30
      %s33 = sphi 0, %s31
      %s34 = sphi 0, %s32
      %s46 = sphi 0, %s48
      %s49 = sphi 0, %s46
      %s50 = sphi 0, %s49
      %s66 = sphi 0, %s50
      %s72 = sphi 0, %s74
      %s75 = sphi 0, %s72
      %s76 = sphi 0, %s75
      %s92 = sphi 0, %s76
      %s100 = sphi 0, %s102
      %s103 = sphi 0, %s100
      %s104 = sphi 0, %s103
      %s120 = sphi 0, %s104
      %s128 = sphi 0, %s130
      %s131 = sphi 0, %s128
      %s132 = sphi 0, %s131
      %s148 = sphi 0, %s132
      %s156 = sphi 0, %s158
      %s159 = sphi 0, %s156
      %s160 = sphi 0, %s159
      %s176 = sphi 0, %s160
      %s184 = sphi 0, %s186
      %s187 = sphi 0, %s184
      %s188 = sphi 0, %s187
      %s204 = sphi 0, %s188
      %s212 = sphi 0, %s214
      %s215 = sphi 0, %s212
      %s216 = sphi 0, %s215
      %s232 = sphi 0, %s216
    $region4: #{tpu_custom_call.1} parent=1 // loop_header_branch
      %25 = sbr.rel (%p23) target = $region8
    $region5: #{tpu_custom_call.1} parent=1 // loop_body
      %s27 = ssub.s32 %s22, 1
      %s28 = ssub.s32 %s22, 2
      %s35 = sadd.s32 1, %s30
      %p36 = scmp.ge.s32.totalorder %s35, 1
      %s37 = scalar_select %p36, 0, %s35
      %s38 = sadd.s32 1, %s29
      %s39 = scalar_select %p36, %s38, %s29
      %p40 = scmp.ge.s32.totalorder %s39, 2
      %s41 = scalar_select %p40, 0, %s39
      %s42 = ssub.s32 %s29, %s41
      %s43 = ssub.s32 %s30, %s37
      %s44 = sor.u32 %s42, %s43
      %p45 = scmp.eq.s32.totalorder %s44, 0
      %s47 = sadd.s32 %s46, 1
      %s48 = scalar_select %p45, %s46, %s47
      %p51 = pneg %p45
      %p52 = scmp.eq.s32.totalorder %s22, 1
      %p53 = por %p51, %p52
      %p54 = scmp.ne.s32.totalorder %s46, %s49
      %p55 = scmp.eq.s32.totalorder %s22, 0
      %p56 = por %p54, %p55
      %p57 = scmp.ne.s32.totalorder %s46, %s49
      %p58 = scmp.eq.s32.totalorder %s27, 1
      %p59 = por %p57, %p58
      %p60 = scmp.ne.s32.totalorder %s49, %s50
      %p61 = scmp.eq.s32.totalorder %s27, 0
      %p62 = por %p60, %p61
      %p63 = scmp.ne.s32.totalorder %s49, %s50
      %p64 = scmp.eq.s32.totalorder %s28, 1
      %p65 = por %p63, %p64
      %p67 = scmp.ne.s32.totalorder %s50, %s66
      %p68 = scmp.eq.s32.totalorder %s28, 0
      %p69 = por %p67, %p68
      %s70 = ssub.s32 %s29, %s41
      %p71 = scmp.eq.s32.totalorder %s70, 0
      %s73 = sadd.s32 %s72, 1
      %s74 = scalar_select %p71, %s72, %s73
      %p77 = pneg %p71
      %p78 = scmp.eq.s32.totalorder %s22, 1
      %p79 = por %p77, %p78
      %p80 = scmp.ne.s32.totalorder %s72, %s75
      %p81 = scmp.eq.s32.totalorder %s22, 0
      %p82 = por %p80, %p81
      %p83 = scmp.ne.s32.totalorder %s72, %s75
      %p84 = scmp.eq.s32.totalorder %s27, 1
      %p85 = por %p83, %p84
      %p86 = scmp.ne.s32.totalorder %s75, %s76
      %p87 = scmp.eq.s32.totalorder %s27, 0
      %p88 = por %p86, %p87
      %p89 = scmp.ne.s32.totalorder %s75, %s76
      %p90 = scmp.eq.s32.totalorder %s28, 1
      %p91 = por %p89, %p90
      %p93 = scmp.ne.s32.totalorder %s76, %s92
      %p94 = scmp.eq.s32.totalorder %s28, 0
      %p95 = por %p93, %p94
      %s96 = ssub.s32 %s29, %s41
      %s97 = ssub.s32 %s30, %s37
      %s98 = sor.u32 %s96, %s97
      %p99 = scmp.eq.s32.totalorder %s98, 0
      %s101 = sadd.s32 %s100, 1
      %s102 = scalar_select %p99, %s100, %s101
      %p105 = pneg %p99
      %p106 = scmp.eq.s32.totalorder %s22, 1
      %p107 = por %p105, %p106
      %p108 = scmp.ne.s32.totalorder %s100, %s103
      %p109 = scmp.eq.s32.totalorder %s22, 0
      %p110 = por %p108, %p109
      %p111 = scmp.ne.s32.totalorder %s100, %s103
      %p112 = scmp.eq.s32.totalorder %s27, 1
      %p113 = por %p111, %p112
      %p114 = scmp.ne.s32.totalorder %s103, %s104
      %p115 = scmp.eq.s32.totalorder %s27, 0
      %p116 = por %p114, %p115
      %p117 = scmp.ne.s32.totalorder %s103, %s104
      %p118 = scmp.eq.s32.totalorder %s28, 1
      %p119 = por %p117, %p118
      %p121 = scmp.ne.s32.totalorder %s104, %s120
      %p122 = scmp.eq.s32.totalorder %s28, 0
      %p123 = por %p121, %p122
      %s124 = ssub.s32 %s29, %s41
      %s125 = ssub.s32 %s30, %s37
      %s126 = sor.u32 %s124, %s125
      %p127 = scmp.eq.s32.totalorder %s126, 0
      %s129 = sadd.s32 %s128, 1
      %s130 = scalar_select %p127, %s128, %s129
      %p133 = pneg %p127
      %p134 = scmp.eq.s32.totalorder %s22, 1
      %p135 = por %p133, %p134
      %p136 = scmp.ne.s32.totalorder %s128, %s131
      %p137 = scmp.eq.s32.totalorder %s22, 0
      %p138 = por %p136, %p137
      %p139 = scmp.ne.s32.totalorder %s128, %s131
      %p140 = scmp.eq.s32.totalorder %s27, 1
      %p141 = por %p139, %p140
      %p142 = scmp.ne.s32.totalorder %s131, %s132
      %p143 = scmp.eq.s32.totalorder %s27, 0
      %p144 = por %p142, %p143
      %p145 = scmp.ne.s32.totalorder %s131, %s132
      %p146 = scmp.eq.s32.totalorder %s28, 1
      %p147 = por %p145, %p146
      %p149 = scmp.ne.s32.totalorder %s132, %s148
      %p150 = scmp.eq.s32.totalorder %s28, 0
      %p151 = por %p149, %p150
      %s152 = ssub.s32 %s29, %s41
      %s153 = ssub.s32 %s30, %s37
      %s154 = sor.u32 %s152, %s153
      %p155 = scmp.eq.s32.totalorder %s154, 0
      %s157 = sadd.s32 %s156, 1
      %s158 = scalar_select %p155, %s156, %s157
      %p161 = pneg %p155
      %p162 = scmp.eq.s32.totalorder %s22, 1
      %p163 = por %p161, %p162
      %p164 = scmp.ne.s32.totalorder %s156, %s159
      %p165 = scmp.eq.s32.totalorder %s22, 0
      %p166 = por %p164, %p165
      %p167 = scmp.ne.s32.totalorder %s156, %s159
      %p168 = scmp.eq.s32.totalorder %s27, 1
      %p169 = por %p167, %p168
      %p170 = scmp.ne.s32.totalorder %s159, %s160
      %p171 = scmp.eq.s32.totalorder %s27, 0
      %p172 = por %p170, %p171
      %p173 = scmp.ne.s32.totalorder %s159, %s160
      %p174 = scmp.eq.s32.totalorder %s28, 1
      %p175 = por %p173, %p174
      %p177 = scmp.ne.s32.totalorder %s160, %s176
      %p178 = scmp.eq.s32.totalorder %s28, 0
      %p179 = por %p177, %p178
      %s180 = ssub.s32 %s29, %s41
      %s181 = ssub.s32 %s30, %s37
      %s182 = sor.u32 %s180, %s181
      %p183 = scmp.eq.s32.totalorder %s182, 0
      %s185 = sadd.s32 %s184, 1
      %s186 = scalar_select %p183, %s184, %s185
      %p189 = pneg %p183
      %p190 = scmp.eq.s32.totalorder %s22, 1
      %p191 = por %p189, %p190
      %p192 = scmp.ne.s32.totalorder %s184, %s187
      %p193 = scmp.eq.s32.totalorder %s22, 0
      %p194 = por %p192, %p193
      %p195 = scmp.ne.s32.totalorder %s184, %s187
      %p196 = scmp.eq.s32.totalorder %s27, 1
      %p197 = por %p195, %p196
      %p198 = scmp.ne.s32.totalorder %s187, %s188
      %p199 = scmp.eq.s32.totalorder %s27, 0
      %p200 = por %p198, %p199
      %p201 = scmp.ne.s32.totalorder %s187, %s188
      %p202 = scmp.eq.s32.totalorder %s28, 1
      %p203 = por %p201, %p202
      %p205 = scmp.ne.s32.totalorder %s188, %s204
      %p206 = scmp.eq.s32.totalorder %s28, 0
      %p207 = por %p205, %p206
      %s208 = ssub.s32 %s29, %s41
      %s209 = ssub.s32 %s30, %s37
      %s210 = sor.u32 %s208, %s209
      %p211 = scmp.eq.s32.totalorder %s210, 0
      %s213 = sadd.s32 %s212, 1
      %s214 = scalar_select %p211, %s212, %s213
      %p217 = pneg %p211
      %p218 = scmp.eq.s32.totalorder %s22, 1
      %p219 = por %p217, %p218
      %p220 = scmp.ne.s32.totalorder %s212, %s215
      %p221 = scmp.eq.s32.totalorder %s22, 0
      %p222 = por %p220, %p221
      %p223 = scmp.ne.s32.totalorder %s212, %s215
      %p224 = scmp.eq.s32.totalorder %s27, 1
      %p225 = por %p223, %p224
      %p226 = scmp.ne.s32.totalorder %s215, %s216
      %p227 = scmp.eq.s32.totalorder %s27, 0
      %p228 = por %p226, %p227
      %p229 = scmp.ne.s32.totalorder %s215, %s216
      %p230 = scmp.eq.s32.totalorder %s28, 1
      %p231 = por %p229, %p230
      %p233 = scmp.ne.s32.totalorder %s216, %s232
      %p234 = scmp.eq.s32.totalorder %s28, 0
      %p235 = por %p233, %p234
      %p236 = scmp.le.s32.totalorder 1, %s22
      %p237 = scmp.lt.s32.totalorder %s22, 3
      %p238 = pnand %p236, %p237
      %p239 = pneg %p238
      // Predicated region
      $region9: #{tpu_custom_call.1} parent=5 // pred_check
        _
      $region10: #{tpu_custom_call.1} parent=5 // pred_check_branch
        %241 = sbr.rel (%p238) target = $region12
      $region11: #{tpu_custom_call.1} parent=5 // pred_region
        %s242 = ssub.s32 %s22, 1
      $region12: #{tpu_custom_call.1} parent=5 // pred_fallthru
        _
      %p243 = scmp.lt.s32.totalorder %s22, 2
      // Predicated region
      $region13: #{tpu_custom_call.1} parent=5 // pred_check
        %p244 = pneg %p243
      $region14: #{tpu_custom_call.1} parent=5 // pred_check_branch
        %246 = sbr.rel (%p244) target = $region16
      $region15: #{tpu_custom_call.1} parent=5 // pred_region
        // Predicated region
        $region17: #{tpu_custom_call.1} parent=15 // pred_check
          %p247 = pneg %p56
        $region18: #{tpu_custom_call.1} parent=15 // pred_check_branch
          %249 = sbr.rel (%p247) target = $region20
        $region19: #{tpu_custom_call.1} parent=15 // pred_region
          %p250 = scmp.lt.s32.totalorder %s29, 1
          %s251 = scalar_select %p250, %s29, 1
          %p252 = scmp.lt.s32.totalorder %s30, 0
          %s253 = scalar_select %p252, %s30, 0
          %s254 = sadd.s32 %s253, %s251
          %s255 = smul.addr %s254, 4
          %s256 = scalar_lea.vmem %s0, %s255
        $region20: #{tpu_custom_call.1} parent=15 // pred_fallthru
          _
        // Predicated region
        $region21: #{tpu_custom_call.1} parent=15 // pred_check
          %p257 = pneg %p82
        $region22: #{tpu_custom_call.1} parent=15 // pred_check_branch
          %259 = sbr.rel (%p257) target = $region24
        $region23: #{tpu_custom_call.1} parent=15 // pred_region
          %p260 = scmp.lt.s32.totalorder %s29, 1
          %s261 = scalar_select %p260, %s29, 1
          %s262 = smul.addr %s261, 8
          %s263 = scalar_lea.vmem %s1, %s262
        $region24: #{tpu_custom_call.1} parent=15 // pred_fallthru
          _
        // Predicated region
        $region25: #{tpu_custom_call.1} parent=15 // pred_check
          %p264 = pneg %p110
        $region26: #{tpu_custom_call.1} parent=15 // pred_check_branch
          %266 = sbr.rel (%p264) target = $region28
        $region27: #{tpu_custom_call.1} parent=15 // pred_region
          %p267 = scmp.lt.s32.totalorder %s29, 1
          %s268 = scalar_select %p267, %s29, 1
          %p269 = scmp.lt.s32.totalorder %s30, 0
          %s270 = scalar_select %p269, %s30, 0
          %s271 = sadd.s32 %s270, %s268
          %s272 = smul.addr %s271, 8
          %s273 = scalar_lea.vmem %s2, %s272
        $region28: #{tpu_custom_call.1} parent=15 // pred_fallthru
          _
        // Predicated region
        $region29: #{tpu_custom_call.1} parent=15 // pred_check
          %p274 = pneg %p138
        $region30: #{tpu_custom_call.1} parent=15 // pred_check_branch
          %276 = sbr.rel (%p274) target = $region32
        $region31: #{tpu_custom_call.1} parent=15 // pred_region
          %s277 = sand.u32 %s128, 1
          %s278 = scalar_lea.sflag [#allocation3], %s277
          %s279 = sand.u32 %s128, 1
          %s280 = smul.addr %s279, 8
          %s281 = scalar_lea.vmem [#allocation2], %s280
          %s283 = ssub.s32 128, 128
          %284 = vsyncadd %s278, %s283
          %s285 = sadd.s32 %s30, %s29
          %s286 = smul.addr %s285, 128
          %s287 = scalar_lea.hbm %s3, %s286
          %s289 = sshll.u32 %s281, 4
          %s290 = int_to_ptr.vmem [resolvable:$true] %s289
          %292 = dma.hbm_to_vmem [thread:$0]  %s287, 128, %s290, %s278
        $region32: #{tpu_custom_call.1} parent=15 // pred_fallthru
          _
      $region16: #{tpu_custom_call.1} parent=5 // pred_fallthru
        _
      %p293 = scmp.le.s32.totalorder 1, %s22
      %p294 = scmp.lt.s32.totalorder %s22, 3
      %p295 = pnand %p293, %p294
      %p296 = pneg %p295
      // Predicated region
      $region33: #{tpu_custom_call.1} parent=5 // pred_check
        _
      $region34: #{tpu_custom_call.1} parent=5 // pred_check_branch
        %298 = sbr.rel (%p295) target = $region36
      $region35: #{tpu_custom_call.1} parent=5 // pred_region
        %s299 = ssub.s32 %s22, 1
        %s300 = sand.u32 %s131, 1
        %s301 = scalar_lea.sflag [#allocation3], %s300
        %s302 = sand.u32 %s131, 1
        %s303 = smul.addr %s302, 8
        %s304 = scalar_lea.vmem [#allocation2], %s303
        // Predicated region
        $region37: #{tpu_custom_call.1} parent=35 // pred_check
          %p305 = pneg %p144
        $region38: #{tpu_custom_call.1} parent=35 // pred_check_branch
          %307 = sbr.rel (%p305) target = $region40
        $region39: #{tpu_custom_call.1} parent=35 // pred_region
          %308 = dma.done %s301, 128
        $region40: #{tpu_custom_call.1} parent=35 // pred_fallthru
          _
        %p309 = scmp.lt.s32.totalorder %s31, 1
        %s310 = scalar_select %p309, %s31, 1
        %p311 = scmp.lt.s32.totalorder %s32, 0
        %s312 = scalar_select %p311, %s32, 0
        %s313 = sadd.s32 %s312, %s310
        %s314 = smul.addr %s313, 4
        %s315 = scalar_lea.vmem %s0, %s314
        %p316 = pneg %p62
        %p317 = pneg %p59
        %p318 = scmp.lt.s32.totalorder %s31, 1
        %s319 = scalar_select %p318, %s31, 1
        %s320 = smul.addr %s319, 8
        %s321 = scalar_lea.vmem %s1, %s320
        %p322 = pneg %p88
        %p323 = pneg %p85
        %p324 = scmp.lt.s32.totalorder %s31, 1
        %s325 = scalar_select %p324, %s31, 1
        %p326 = scmp.lt.s32.totalorder %s32, 0
        %s327 = scalar_select %p326, %s32, 0
        %s328 = sadd.s32 %s327, %s325
        %s329 = smul.addr %s328, 8
        %s330 = scalar_lea.vmem %s2, %s329
        %p331 = pneg %p116
        %p332 = pneg %p113
        %s333 = sand.u32 %s131, 1
        %s334 = scalar_lea.sflag [#allocation3], %s333
        %s335 = sand.u32 %s131, 1
        %s336 = smul.addr %s335, 8
        %s337 = scalar_lea.vmem [#allocation2], %s336
        %p338 = pneg %p144
        %p339 = pneg %p141
        %p340 = pneg %p172
        %p341 = pneg %p169
        %s342 = sand.u32 %s159, 1
        %s343 = scalar_lea.sflag [#allocation4], %s342
        %s344 = sand.u32 %s159, 1
        %s345 = smul.addr %s344, 8
        %s346 = scalar_lea.vmem [#allocation5], %s345
        %p347 = pneg %p200
        %p348 = pneg %p197
        %s349 = sand.u32 %s27, 1
        %s350 = scalar_lea.sflag [#allocation7], %s349
        %s351 = sand.u32 %s187, 1
        %s352 = smul.addr %s351, 8
        %s353 = scalar_lea.vmem [#allocation6], %s352
        %p354 = pneg %p228
        %p355 = pneg %p225
        %s356 = sand.u32 %s27, 1
        %s357 = scalar_lea.sflag [#allocation7], %s356
        %s358 = sand.u32 %s215, 1
        %s359 = smul.addr %s358, 8
        %s360 = scalar_lea.vmem [#allocation8], %s359
        %p361 = scmp.lt.s32.totalorder %s31, 1
        %s362 = scalar_select %p361, %s31, 1
        %p363 = scmp.lt.s32.totalorder %s32, 0
        %s364 = scalar_select %p363, %s32, 0
        %s365 = sadd.s32 %s364, %s362
        %s366 = smul.addr %s365, 4
        %s367 = scalar_lea.vmem %s0, %s366
        %p368 = scmp.lt.s32.totalorder %s31, 1
        %s369 = scalar_select %p368, %s31, 1
        %s370 = smul.addr %s369, 8
        %s371 = scalar_lea.vmem %s1, %s370
        %p372 = scmp.lt.s32.totalorder %s31, 1
        %s373 = scalar_select %p372, %s31, 1
        %p374 = scmp.lt.s32.totalorder %s32, 0
        %s375 = scalar_select %p374, %s32, 0
        %s376 = sadd.s32 %s375, %s373
        %s377 = smul.addr %s376, 8
        %s378 = scalar_lea.vmem %s2, %s377
        %v379 = vld [vmem:[%s367] sm:$0xf]
        %v380 = vld [vmem:[%s371] sm:$0xff]
        %v381 = vlaneseq
        %v382 = vshrl.u32 %v381, 7
        %v383 = vsub.s32 2, %v382
        %v384 = vrot.slane %v379, %v383
        %386 = vset.pattern.permute.xlu0 2
        %387 = vperm.xlu0 %386, %v380
        %v388 = vpop.permute.xlu0 %387
        %v390 = vmin.f32 %v384, %v388
        %v391 = vlaneseq
        %v392 = vshrl.u32 %v391, 7
        %v393 = vsub.s32 0, %v392
        %v394 = vrot.slane %v379, %v393
        %395 = vset.pattern.permute.xlu0 0
        %396 = vperm.xlu0 %395, %v380
        %v397 = vpop.permute.xlu0 %396
        %v399 = vmax.f32 %v394, %v397
        %v400 = vsub.f32 %v390, %v399
        %v401 = vmax.f32 %v400, 0.0
        %v402 = vlaneseq
        %v403 = vshrl.u32 %v402, 7
        %v404 = vsub.s32 3, %v403
        %v405 = vrot.slane %v379, %v404
        %406 = vset.pattern.permute.xlu0 3
        %407 = vperm.xlu0 %406, %v380
        %v408 = vpop.permute.xlu0 %407
        %v410 = vmin.f32 %v405, %v408
        %v411 = vlaneseq
        %v412 = vshrl.u32 %v411, 7
        %v413 = vsub.s32 1, %v412
        %v414 = vrot.slane %v379, %v413
        %415 = vset.pattern.permute.xlu0 1
        %416 = vperm.xlu0 %415, %v380
        %v417 = vpop.permute.xlu0 %416
        %v419 = vmax.f32 %v414, %v417
        %v420 = vsub.f32 %v410, %v419
        %v421 = vmax.f32 %v420, 0.0
        %v422 = vmul.f32 %v401, %v421
        %v424 = vrot.slane %v379, 6
        %v426 = vsub.f32 %v379, %v424
        %v428 = vrot.slane %v426, 1
        %v430 = vmul.f32 %v426, %v428
        %431 = vrot.lane.b32.xlu0 %v380, 2
        %v432 = vpop.permute.xlu0 %431
        %v434 = vsub.f32 %v380, %v432
        %436 = vrot.lane.b32.xlu0 %v434, 127
        %v437 = vpop.permute.xlu0 %436
        %v439 = vmul.f32 %v434, %v437
        %v440 = vlaneseq
        %v441 = vshrl.u32 %v440, 7
        %v442 = vsub.s32 2, %v441
        %v443 = vrot.slane %v430, %v442
        %445 = vset.pattern.permute.xlu0 2
        %446 = vperm.xlu0 %445, %v439
        %v447 = vpop.permute.xlu0 %446
        %v449 = vadd.f32 %v443, %v447
        %v450 = vsub.f32 %v449, %v422
        %v451 = vadd.f32 %v450, 1e-15
        %v452 = vmul.f32 %v451, 0.5
        %vm453 = vcmp.gt.f32.partialorder %v422, %v452
        %v454 = vsel %vm453, 1.0, 0.0
        %v455 = vrot.slane %v454, 4
        %v456 = vmax.f32 %v454, %v455
        %v457 = vrot.slane %v456, 2
        %v458 = vmax.f32 %v456, %v457
        %v459 = vrot.slane %v458, 1
        %v460 = vmax.f32 %v458, %v459
        %vm461 = vcmp.gt.f32.partialorder %v460, 0.0
        %v462 = vsel %vm461, -1.0, 0.0
        %v463 = vld [vmem:[%s378] sm:$0xff]
        %vm464 = vcmp.gt.f32.partialorder %v463, 0.0
        %v465 = vlaneseq
        %v466 = vshrl.u32 %v465, 7
        %vm467 = vcmp.eq.s32.totalorder %v466, 0
        %v468 = vsel %vm467, %v462, 0.0
        %v469 = vsel %vm464, 1, 0
        %v470 = vlaneseq
        %v471 = vshrl.u32 %v470, 7
        %v472 = vsub.s32 0, %v471
        %v473 = vrot.slane %v469, %v472
        %vm474 = vcmp.eq.s32.totalorder %v473, 1
        %v475 = vsel %vm474, %v463, %v468
        %476 = vst [vmem:[%s346] sm:$0xff] %v475
        %v477 = vld [vmem:[%s304] sm:$0xff]
        %v478 = vsel %vm474, %v477, -1.0
        %479 = vst [vmem:[%s353] sm:$0xff] %v478
        %vm480 = vcmp.ge.f32.partialorder %v477, 0.0
        %vm481 = vmand %vm474, %vm480
        %v482 = vsel %vm481, 1, 0
        %v483 = vcvt.s32.f32 %v482
        %484 = vst [vmem:[%s360] sm:$0xff] %v483
        %s485 = sand.u32 %s159, 1
        %s486 = scalar_lea.sflag [#allocation4], %s485
        %s487 = sand.u32 %s159, 1
        %s488 = smul.addr %s487, 8
        %s489 = scalar_lea.vmem [#allocation5], %s488
        %s490 = sand.u32 %s27, 1
        %s491 = scalar_lea.sflag [#allocation7], %s490
        %s492 = sand.u32 %s187, 1
        %s493 = smul.addr %s492, 8
        %s494 = scalar_lea.vmem [#allocation6], %s493
        %s495 = sand.u32 %s27, 1
        %s496 = scalar_lea.sflag [#allocation7], %s495
        %s497 = sand.u32 %s215, 1
        %s498 = smul.addr %s497, 8
        %s499 = scalar_lea.vmem [#allocation8], %s498
        // Predicated region
        $region41: #{tpu_custom_call.1} parent=35 // pred_check
          %p500 = pneg %p169
        $region42: #{tpu_custom_call.1} parent=35 // pred_check_branch
          %502 = sbr.rel (%p500) target = $region44
        $region43: #{tpu_custom_call.1} parent=35 // pred_region
          %s504 = ssub.s32 128, 128
          %505 = vsyncadd %s486, %s504
          %s506 = sadd.s32 %s32, %s31
          %s507 = smul.addr %s506, 128
          %s508 = scalar_lea.hbm %s4, %s507
          %s510 = sshll.u32 %s489, 4
          %s511 = int_to_ptr.vmem [resolvable:$true] %s510
          %513 = dma.vmem_to_hbm [thread:$0]  %s511, 128, %s508, %s486
        $region44: #{tpu_custom_call.1} parent=35 // pred_fallthru
          _
        // Predicated region
        $region45: #{tpu_custom_call.1} parent=35 // pred_check
          %p514 = pneg %p197
        $region46: #{tpu_custom_call.1} parent=35 // pred_check_branch
          %516 = sbr.rel (%p514) target = $region48
        $region47: #{tpu_custom_call.1} parent=35 // pred_region
          %s518 = ssub.s32 128, 128
          %519 = vsyncadd %s491, %s518
          %s520 = sadd.s32 %s32, %s31
          %s521 = smul.addr %s520, 128
          %s522 = scalar_lea.hbm %s5, %s521
          %s524 = sshll.u32 %s494, 4
          %s525 = int_to_ptr.vmem [resolvable:$true] %s524
          %527 = dma.vmem_to_hbm [thread:$0]  %s525, 128, %s522, %s491
        $region48: #{tpu_custom_call.1} parent=35 // pred_fallthru
          _
        // Predicated region
        $region49: #{tpu_custom_call.1} parent=35 // pred_check
          %p528 = pneg %p225
        $region50: #{tpu_custom_call.1} parent=35 // pred_check_branch
          %530 = sbr.rel (%p528) target = $region52
        $region51: #{tpu_custom_call.1} parent=35 // pred_region
          %s532 = ssub.s32 128, 128
          %533 = vsyncadd %s496, %s532
          %s534 = sadd.s32 %s32, %s31
          %s535 = smul.addr %s534, 128
          %s536 = scalar_lea.hbm %s6, %s535
          %s538 = sshll.u32 %s499, 4
          %s539 = int_to_ptr.vmem [resolvable:$true] %s538
          %541 = dma.vmem_to_hbm [thread:$0]  %s539, 128, %s536, %s496
        $region52: #{tpu_custom_call.1} parent=35 // pred_fallthru
          _
      $region36: #{tpu_custom_call.1} parent=5 // pred_fallthru
        _
      %p542 = scmp.le.s32.totalorder 2, %s22
      // Predicated region
      $region53: #{tpu_custom_call.1} parent=5 // pred_check
        %p543 = pneg %p542
      $region54: #{tpu_custom_call.1} parent=5 // pred_check_branch
        %545 = sbr.rel (%p543) target = $region56
      $region55: #{tpu_custom_call.1} parent=5 // pred_region
        %s546 = ssub.s32 %s22, 2
        // Predicated region
        $region57: #{tpu_custom_call.1} parent=55 // pred_check
          %p547 = pneg %p175
        $region58: #{tpu_custom_call.1} parent=55 // pred_check_branch
          %549 = sbr.rel (%p547) target = $region60
        $region59: #{tpu_custom_call.1} parent=55 // pred_region
          %s550 = sand.u32 %s160, 1
          %s551 = scalar_lea.sflag [#allocation4], %s550
          %s552 = sand.u32 %s160, 1
          %s553 = smul.addr %s552, 8
          %s554 = scalar_lea.vmem [#allocation5], %s553
          %555 = dma.done %s551, 128
        $region60: #{tpu_custom_call.1} parent=55 // pred_fallthru
          _
        // Predicated region
        $region61: #{tpu_custom_call.1} parent=55 // pred_check
          %p556 = pneg %p203
        $region62: #{tpu_custom_call.1} parent=55 // pred_check_branch
          %558 = sbr.rel (%p556) target = $region64
        $region63: #{tpu_custom_call.1} parent=55 // pred_region
          %s559 = sand.u32 %s28, 1
          %s560 = scalar_lea.sflag [#allocation7], %s559
          %s561 = sand.u32 %s188, 1
          %s562 = smul.addr %s561, 8
          %s563 = scalar_lea.vmem [#allocation6], %s562
          %564 = dma.done %s560, 128
        $region64: #{tpu_custom_call.1} parent=55 // pred_fallthru
          _
        // Predicated region
        $region65: #{tpu_custom_call.1} parent=55 // pred_check
          %p565 = pneg %p231
        $region66: #{tpu_custom_call.1} parent=55 // pred_check_branch
          %567 = sbr.rel (%p565) target = $region68
        $region67: #{tpu_custom_call.1} parent=55 // pred_region
          %s568 = sand.u32 %s28, 1
          %s569 = scalar_lea.sflag [#allocation7], %s568
          %s570 = sand.u32 %s216, 1
          %s571 = smul.addr %s570, 8
          %s572 = scalar_lea.vmem [#allocation8], %s571
          %573 = dma.done %s569, 128
        $region68: #{tpu_custom_call.1} parent=55 // pred_fallthru
          _
      $region56: #{tpu_custom_call.1} parent=5 // pred_fallthru
        _
    $region6: #{tpu_custom_call.1} parent=1 // loop_footer
      %s26 = sadd.s32 1, %s22
    $region7: #{tpu_custom_call.1} parent=1 // loop_footer_branch
      %21 = sbr.rel target = $region3
    $region8: #{tpu_custom_call.1} parent=1 // loop_exit
      _
    %574 = vsyncpa [#allocation3], 1
    %s575 = scalar_lea.sflag [#allocation3], 1
    %576 = vsyncpa %s575, 1
    %577 = vsyncpa [#allocation4], 1
    %s578 = scalar_lea.sflag [#allocation4], 1
    %579 = vsyncpa %s578, 1
    %580 = vsyncpa [#allocation7], 1
    %s581 = scalar_lea.sflag [#allocation7], 1
    %582 = vsyncpa %s581, 1

</llo_original>
